<compile_context>
chip_gen: v7x
topology: tpu7x:2x2x1
jax: 0.10.0
libtpu: 0.0.40
codegen_flags: <defaults>
</compile_context>

<pallas_src>
import math

import jax
import jax.numpy as jnp
import numpy as np
from jax.experimental import pallas as pl
from jax.experimental.pallas import tpu as pltpu

_LANES = 128


def _round_up(x: int, m: int) -> int:
    return ((x + m - 1) // m) * m


def _pe_slab_kernel(a_ref, b_ref, o_ref):
    """out[r, l] = sin(global_row(r) * A[l] + B[l]) — lane-dense (rows, C) slab."""
    R = o_ref.shape[0]
    row = (jax.lax.broadcasted_iota(jnp.int32, (R, 1), 0)
           + pl.program_id(0) * R).astype(jnp.float32)            # (R, 1)
    o_ref[...] = jnp.sin(row * a_ref[...] + b_ref[...]).astype(o_ref.dtype)


def positional_encoding(x: jax.Array, d_model: int, *, dtype=jnp.float32) -> jax.Array:
    """Returns pe[:, :x.shape[1]] of shape (1, seq_len, d_model).

    dtype defaults to float32 to match the PyTorch buffer; pass jnp.bfloat16
    if the consumer runs in bf16 (sin is computed in f32, cast on store) —
    halves the store traffic of this output-bound kernel (biggest win on v5e).
    """
    seq_len = int(x.shape[1])
    if d_model % 2 != 0:
        # The PyTorch reference also errors out for odd d_model.
        raise ValueError("d_model must be even for sinusoidal positional encoding.")

    # Lane-dense slab geometry: C lanes cover ppr full positions per slab row.
    C = d_model * _LANES // math.gcd(d_model, _LANES)   # lcm(d_model, 128)
    ppr = C // d_model                                   # positions per slab row
    rows = pl.cdiv(seq_len, ppr)
    total = seq_len * d_model

    # Trace-time per-lane constants (numpy):
    #   arg(p, c) = p * inv_freq[c] + phase[c],  p = row*ppr + l//d_model,
    #   c = l % d_model   =>   arg = row * A[l] + B[l]
    l = np.arange(C)
    c = l % d_model
    lane_off = (l // d_model).astype(np.float32)
    inv_freq = np.exp((c - (c % 2)).astype(np.float32) * (-math.log(10000.0) / d_model))
    phase = np.where((c % 2) == 0, 0.0, math.pi / 2.0).astype(np.float32)
    a_const = jnp.asarray((ppr * inv_freq).astype(np.float32)[None, :])            # (1, C)
    b_const = jnp.asarray((lane_off * inv_freq + phase).astype(np.float32)[None, :])  # (1, C)

    # Block sizing: ~4 MiB blocks (8-row aligned); tiny tables in one step,
    # big tables in >=2 steps for v7x's two TensorCores.
    itemsize = jnp.dtype(dtype).itemsize
    bytes_per_row = C * itemsize
    if rows * bytes_per_row <= 512 * 1024:
        block_rows = rows                                  # single step; overhead-bound regime
    else:
        cap = max(8, (4 * 1024 * 1024 // bytes_per_row) // 8 * 8)
        block_rows = min(rows, min(cap, _round_up(pl.cdiv(rows, 2), 8)))
    grid = (pl.cdiv(rows, block_rows),)

    compiler_params = pltpu.CompilerParams(
        dimension_semantics=("parallel",),                 # megacore sharding on v7x
        vmem_limit_bytes=32 * 1024 * 1024,                 # safe within v7x's 64 MiB VMEM
    )

    slab = pl.pallas_call(
        _pe_slab_kernel,
        out_shape=jax.ShapeDtypeStruct((rows, C), dtype),
        grid=grid,
        in_specs=[pl.BlockSpec((1, C), lambda i: (0, 0)),
                  pl.BlockSpec((1, C), lambda i: (0, 0))],
        out_specs=pl.BlockSpec((block_rows, C), lambda i: (i, 0)),
        compiler_params=compiler_params,
    )(a_const, b_const)

    if rows * C == total:
        # seq_len % ppr == 0 (always true when d_model % 128 == 0):
        # pure metadata reshape, no extra HBM traffic.
        pe2d = slab.reshape(seq_len, d_model)
    else:
        # Misaligned total: one small slice copy.
        # TODO(synk): hand the padded (rows, C) slab to the consumer (or pad
        # seq_len at the call site) to avoid this extra read+write.
        pe2d = slab.reshape(-1)[:total].reshape(seq_len, d_model)
    return pe2d[None, :, :]


def _reference_pe(seq_len: int, d_model: int) -> np.ndarray:
    pe = np.zeros((seq_len, d_model), dtype=np.float32)
    position = np.arange(0, seq_len, dtype=np.float32)[:, None]
    div_term = np.exp(
        np.arange(0, d_model, 2, dtype=np.float32) * (-np.log(10000.0) / d_model)
    )
    pe[:, 0::2] = np.sin(position * div_term)
    pe[:, 1::2] = np.cos(position * div_term)
    return pe[None]


if __name__ == "__main__":
    key = jax.random.PRNGKey(0)

    # Primary shape: batch=2, seq_len=8, d_model=32 (d_model divides 128).
    B, L, D = 2, 8, 32
    x = jax.random.normal(key, (B, L, D), dtype=jnp.float32)
    out = jax.block_until_ready(positional_encoding(x, d_model=D))
    assert out.shape == (1, L, D), out.shape
    np.testing.assert_allclose(np.asarray(out), _reference_pe(L, D), rtol=1e-5, atol=1e-5)

    # General even d_model (neither divides nor is a multiple of 128).
    L2, D2 = 16, 48
    x2 = jax.random.normal(key, (B, L2, D2), dtype=jnp.float32)
    out2 = jax.block_until_ready(positional_encoding(x2, d_model=D2))
    assert out2.shape == (1, L2, D2), out2.shape
    np.testing.assert_allclose(np.asarray(out2), _reference_pe(L2, D2), rtol=1e-5, atol=1e-5)

    # Misaligned total (exercises the wrapper slice path).
    L3, D3 = 10, 48
    x3 = jax.random.normal(key, (B, L3, D3), dtype=jnp.float32)
    out3 = jax.block_until_ready(positional_encoding(x3, d_model=D3))
    assert out3.shape == (1, L3, D3), out3.shape
    np.testing.assert_allclose(np.asarray(out3), _reference_pe(L3, D3), rtol=1e-5, atol=1e-5)

    # d_model that is a multiple of 128 (natural layout already lane-dense).
    L4, D4 = 12, 128
    x4 = jax.random.normal(key, (B, L4, D4), dtype=jnp.float32)
    out4 = jax.block_until_ready(positional_encoding(x4, d_model=D4))
    assert out4.shape == (1, L4, D4), out4.shape
    np.testing.assert_allclose(np.asarray(out4), _reference_pe(L4, D4), rtol=1e-5, atol=1e-5)

    print("KERNEL_OK")
</pallas_src>

<mosaic_0001>
module attributes {stable_mosaic.version = 11 : i64} {
  func.func @_pe_slab_kernel(%arg0: i32, %arg1: memref<1x128xf32, #tpu.memory_space<vmem>>, %arg2: memref<1x128xf32, #tpu.memory_space<vmem>>, %arg3: memref<2x128xf32, #tpu.memory_space<vmem>>) attributes {dimension_semantics = [#tpu.dimension_semantics<parallel>], iteration_bounds = array<i64: 1>, scalar_prefetch = 0 : i64, scratch_operands = 0 : i64, tpu.core_type = #tpu.core_type<tc>, window_params = [{pipeline_mode = #tpu.pipeline_mode<synchronous>, transform_indices = @transform_0, window_bounds = array<i64: 1, 128>}, {pipeline_mode = #tpu.pipeline_mode<synchronous>, transform_indices = @transform_1, window_bounds = array<i64: 1, 128>}, {transform_indices = @transform_2, window_bounds = array<i64: 2, 128>}]} {
    %0 = tpu.iota {dimensions = array<i32: 0>} : vector<2x1xi32>
    %c2_i32 = arith.constant 2 : i32
    %1 = arith.muli %arg0, %c2_i32 : i32
    %2 = vector.broadcast %1 : i32 to vector<2x1xi32>
    %3 = arith.addi %0, %2 : vector<2x1xi32>
    %4 = arith.sitofp %3 : vector<2x1xi32> to vector<2x1xf32>
    %c0 = arith.constant 0 : index
    %c0_0 = arith.constant 0 : index
    %5 = vector.load %arg1[%c0, %c0_0] : memref<1x128xf32, #tpu.memory_space<vmem>>, vector<1x128xf32>
    %6 = vector.broadcast %4 : vector<2x1xf32> to vector<2x128xf32>
    %7 = vector.broadcast %5 : vector<1x128xf32> to vector<2x128xf32>
    %8 = arith.mulf %6, %7 : vector<2x128xf32>
    %c0_1 = arith.constant 0 : index
    %c0_2 = arith.constant 0 : index
    %9 = vector.load %arg2[%c0_1, %c0_2] : memref<1x128xf32, #tpu.memory_space<vmem>>, vector<1x128xf32>
    %10 = vector.broadcast %9 : vector<1x128xf32> to vector<2x128xf32>
    %11 = arith.addf %8, %10 : vector<2x128xf32>
    %12 = math.sin %11 : vector<2x128xf32>
    %c0_3 = arith.constant 0 : index
    %c0_4 = arith.constant 0 : index
    %13 = vector.load %arg3[%c0_3, %c0_4] : memref<2x128xf32, #tpu.memory_space<vmem>>, vector<2x128xf32>
    tpu.vector_store %arg3[%c0_3, %c0_4], %12 {strides = array<i32>} : memref<2x128xf32, #tpu.memory_space<vmem>>, vector<2x128xf32>,
    return
  }
  func.func @transform_0(%arg0: i32) -> (i32, i32) {
    %c0_i32 = arith.constant 0 : i32
    %c0_i32_0 = arith.constant 0 : i32
    %c0_i32_1 = arith.constant 0 : i32
    return %c0_i32, %c0_i32_0 : i32, i32
  }
  func.func @transform_1(%arg0: i32) -> (i32, i32) {
    %c0_i32 = arith.constant 0 : i32
    %c0_i32_0 = arith.constant 0 : i32
    %c0_i32_1 = arith.constant 0 : i32
    return %c0_i32, %c0_i32_0 : i32, i32
  }
  func.func @transform_2(%arg0: i32) -> (i32, i32) {
    %c0_i32 = arith.constant 0 : i32
    %c0_i32_0 = arith.constant 0 : i32
    return %arg0, %c0_i32 : i32, i32
  }
}

</mosaic_0001>

<llo_original>
// kernel: tpu_custom_call.1
$region0: #{tpu_custom_call.1}
  #allocation0 [shape = 'u32[]', space=smem, size = 0x4, offset = 0x4, fixed_abs, tag = 'smem constant byte address 0x4 - core index']
  #allocation1 [shape = 'u32[144,128]{1,0:T(1,128)}', space=vmem, size = 0x12000, scoped, tag = 'internal scratch']
  %s0 = inlined_call_operand.hbm [shape: f32[1,128], index: 0, kind: input, shape index: {}]
  %s1 = inlined_call_operand.vmem [shape: f32[1,128], index: 1, kind: input, shape index: {}]
  %s2 = inlined_call_operand.hbm [shape: f32[2,128], index: 2, kind: output, shape index: {}]
  %s3 = sld [smem:[#allocation0]]
  $region22: #{tpu_custom_call.1} parent=0
    _
  %s5 = ssub.s32 1, %s3
  %s6 = scalar_select 0, %s5, %s3
  $region1: #{tpu_custom_call.1} parent=0
    #allocation2 [shape = 'u8[512]{0}', space=vmem, size = 0x400, scoped, tag = 'input window, operand 0, single buffered']
    #allocation3 [shape = 's32[1]{0}', space=sflag, size = 0x4, scoped, tag = 'scoped memory for tpu_custom_call.1']
    #allocation4 [shape = 's32[1]{0}', space=sflag, size = 0x4, scoped, tag = 'scoped memory for tpu_custom_call.1']
    #allocation5 [shape = 'u8[1024]{0}', space=vmem, size = 0x400, scoped, tag = 'output window, operand 0, single buffered']
    %7 = vsyncpa [#allocation3], 0
    %8 = vsyncpa [#allocation4], 0
    // Predicated region
    $region2: #{tpu_custom_call.1} parent=1 // pred_check
      _
    $region3: #{tpu_custom_call.1} parent=1 // pred_check_branch
      %10 = sbr.rel (0) target = $region5
    $region4: #{tpu_custom_call.1} parent=1 // pred_region
      %s12 = ssub.s32 16, 16
      %13 = vsyncadd [#allocation3], %s12
      %s15 = sshll.u32 [#allocation2], 4
      %s16 = int_to_ptr.vmem [resolvable:$true] %s15
      %18 = dma.hbm_to_vmem [thread:$0]  %s0, 16, %s16, [#allocation3]
    $region5: #{tpu_custom_call.1} parent=1 // pred_fallthru
      _
    // Predicated region
    $region6: #{tpu_custom_call.1} parent=1 // pred_check
      _
    $region7: #{tpu_custom_call.1} parent=1 // pred_check_branch
      %20 = sbr.rel (0) target = $region9
    $region8: #{tpu_custom_call.1} parent=1 // pred_region
      _
    $region9: #{tpu_custom_call.1} parent=1 // pred_fallthru
      _
    // Predicated region
    $region10: #{tpu_custom_call.1} parent=1 // pred_check
      _
    $region11: #{tpu_custom_call.1} parent=1 // pred_check_branch
      %22 = sbr.rel (0) target = $region13
    $region12: #{tpu_custom_call.1} parent=1 // pred_region
      %23 = dma.done [#allocation3], 16
    $region13: #{tpu_custom_call.1} parent=1 // pred_fallthru
      _
    %v24 = vlaneseq
    %v25 = vshrl.u32 %v24, 7
    %s26 = smul.u32 0, 2
    %v27 = vstv %s26
    %v28 = vadd.s32 %v25, %v27
    %v29 = vcvt.s32.f32 %v28
    %v30 = vld [vmem:[#allocation2] sm:$0x1]
    %v32 = vlaneseq
    %v33 = vshrl.u32 %v32, 7
    %v34 = vsub.s32 0, %v33
    %v35 = vrot.slane %v30, %v34
    %v37 = vmul.f32 %v29, %v35
    %v38 = vld [vmem:[%s1] sm:$0x1]
    %v40 = vlaneseq
    %v41 = vshrl.u32 %v40, 7
    %v42 = vsub.s32 0, %v41
    %v43 = vrot.slane %v38, %v42
    %v45 = vadd.f32 %v37, %v43
    %v46 = vand.u32 2147483647, %v45
    %vm47 = vcmp.le.f32.partialorder %v46, 0.7853982
    %vm48 = vcmp.lt.s32.totalorder %v45, 0
    %v49 = vand.u32 %v45, 2139095040
    %v50 = vshrl.u32 %v49, 23
    %v51 = vsub.s32 %v50, 127
    %v52 = vand.u32 2147483647, %v45
    %v53 = vand.u32 %v52, 8388607
    %v54 = vor.u32 %v53, 8388608
    %v55 = vsub.s32 0, %v54
    %v56 = vadd.s32 %v51, 1
    %vm57 = vcmp.gt.s32.totalorder %v56, 0
    %v58 = vsel %vm57, %v56, 0
    %v59 = vshrl.u32 %v58, 5
    %v60 = vand.u32 %v58, 31
    %v61 = vsub.s32 32, %v60
    %v62 = vshrl.u32 683565275, %v61
    %v63 = vshll.u32 683565275, %v60
    %v64 = vshrl.u32 2475754826, %v61
    %v65 = vor.u32 %v63, %v64
    %v66 = vshll.u32 2475754826, %v60
    %v67 = vshrl.u32 2131351028, %v61
    %v68 = vor.u32 %v66, %v67
    %v69 = vshll.u32 2131351028, %v60
    %v70 = vshrl.u32 2102212464, %v61
    %v71 = vor.u32 %v69, %v70
    %v72 = vshll.u32 2102212464, %v60
    %v73 = vshrl.u32 920167782, %v61
    %v74 = vor.u32 %v72, %v73
    %v75 = vshll.u32 920167782, %v60
    %v76 = vshrl.u32 1326507024, %v61
    %v77 = vor.u32 %v75, %v76
    %vm78 = vcmp.lt.s32.totalorder %v59, 1
    %vm79 = vcmp.lt.s32.totalorder %v59, 2
    %vm80 = vcmp.lt.s32.totalorder %v59, 3
    %vm81 = vcmp.lt.s32.totalorder %v59, 4
    %v82 = vsel %vm78, %v62, %v65
    %v83 = vsel %vm81, %v71, 2102212464
    %v84 = vsel %vm80, %v68, %v83
    %v85 = vsel %vm79, %v82, %v84
    %v86 = vsel %vm78, %v65, %v68
    %v87 = vsel %vm81, %v74, 920167782
    %v88 = vsel %vm80, %v71, %v87
    %v89 = vsel %vm79, %v86, %v88
    %v90 = vsel %vm78, %v68, %v71
    %v91 = vsel %vm81, %v77, 1326507024
    %v92 = vsel %vm80, %v74, %v91
    %v93 = vsel %vm79, %v90, %v92
    %v94 = vshll.u32 %v54, 8
    %v95 = vmul.u32.u64.compose %v94, %v93
    %v96 = vextract.low.u32 %v95
    %v97 = vextract.high.u32 %v95
    %v98 = vmul.u32.u64.compose %v94, %v89
    %v99 = vextract.low.u32 %v98
    %v100 = vextract.high.u32 %v98
    %v101 = vmul.u32 %v94, %v85
    %v102 = vadd.s32 %v97, %v99
    %vm103 = vc.u32 %v97, %v99
    %v104 = vadd.s32 %v100, 1
    %v105 = vsel %vm103, %v104, %v100
    %v106 = vadd.s32 %v101, %v105
    %v107 = vadd.s32 %v106, 536870912
    %v108 = vshrl.u32 %v107, 30
    %v109 = vshll.u32 %v108, 30
    %v110 = vsub.s32 %v106, %v109
    %vm111 = vcmp.lt.s32.totalorder %v110, 0
    %v112 = vsub.s32 0, %v110
    %v113 = vsel %vm111, %v112, %v110
    %v114 = vclz %v113
    %v115 = vsub.s32 %v114, 2
    %vm116 = vcmp.gt.s32.totalorder 0, %v115
    %v117 = vsel %vm116, 0, %v115
    %v118 = vsub.s32 32, %v117
    %v119 = vshll.u32 %v110, %v117
    %v120 = vshrl.u32 %v102, %v118
    %v121 = vor.u32 %v119, %v120
    %v122 = vsub.s32 4294967266, %v117
    %v123 = vadd.s32 %v122, 127
    %v124 = vshll.u32 %v123, 23
    %v125 = vor.u32 4788187, %v124
    %v126 = vand.u32 2147483647, %v125
    %v128 = vcvt.s32.f32 %v121
    %v129 = vmul.f32 %v128, %v126
    %v130 = vxor.u32 %v129, 2147483648
    %v131 = vsel %vm48, %v130, %v129
    %v132 = vsub.s32 4, %v108
    %v133 = vsel %vm48, %v132, %v108
    %v134 = vsel %vm47, %v45, %v131
    %v135 = vsel %vm47, 0, %v133
    %v136 = vcosq.f32.pop %v134
    %v137 = vsinq.f32.pop %v134
    %vm138 = vweird.f32 %v45
    %v139 = vadd.s32 %v135, 3
    %v140 = vand.u32 %v139, 3
    %vm141 = vcmp.lt.s32.totalorder %v140, 2
    %vm142 = vcmp.eq.s32.totalorder %v140, 0
    %v143 = vxor.u32 %v137, 2147483648
    %v144 = vsel %vm142, %v136, %v143
    %vm145 = vcmp.eq.s32.totalorder %v140, 2
    %v146 = vxor.u32 %v136, 2147483648
    %v147 = vsel %vm145, %v146, %v137
    %v148 = vsel %vm141, %v144, %v147
    %v149 = vsel %vm138, nan, %v148
    %150 = vst [vmem:[#allocation5] sm:$0x3] %v149
    // Predicated region
    $region14: #{tpu_custom_call.1} parent=1 // pred_check
      _
    $region15: #{tpu_custom_call.1} parent=1 // pred_check_branch
      %152 = sbr.rel (0) target = $region17
    $region16: #{tpu_custom_call.1} parent=1 // pred_region
      %s154 = ssub.s32 32, 32
      %155 = vsyncadd [#allocation4], %s154
      %s157 = sshll.u32 [#allocation5], 4
      %s158 = int_to_ptr.vmem [resolvable:$true] %s157
      %160 = dma.vmem_to_hbm [thread:$0]  %s158, 32, %s2, [#allocation4]
    $region17: #{tpu_custom_call.1} parent=1 // pred_fallthru
      _
    // Predicated region
    $region18: #{tpu_custom_call.1} parent=1 // pred_check
      _
    $region19: #{tpu_custom_call.1} parent=1 // pred_check_branch
      %162 = sbr.rel (0) target = $region21
    $region20: #{tpu_custom_call.1} parent=1 // pred_region
      %163 = dma.done [#allocation4], 32
    $region21: #{tpu_custom_call.1} parent=1 // pred_fallthru
      _
    %164 = vsyncpa [#allocation3], 1
    %165 = vsyncpa [#allocation4], 1

</llo_original>
